<compile_context>
chip_gen: v7x
topology: tpu7x:2x2x1
jax: 0.10.0
libtpu: 0.0.40
codegen_flags: <defaults>
</compile_context>

<pallas_src>
import functools

import jax
import jax.numpy as jnp
from jax.experimental import pallas as pl
from jax.experimental.pallas import tpu as pltpu

_MIB = 1024 * 1024


def _round_up(x: int, m: int) -> int:
    return (x + m - 1) // m * m


def _vmem_limit_bytes() -> int:
    """Generation-aware scoped-VMEM limit: ~3/4 of physical VMEM, capped.

    v5e/v6e (128 MiB physical) -> 96 MiB, v7x (64 MiB per TC) -> 48 MiB,
    conservative 48 MiB fallback if the query is unavailable.
    """
    cap = 64 * _MIB
    try:
        info = pltpu.get_tpu_info()
        cap = int(getattr(info, "vmem_capacity_bytes", cap) or cap)
    except Exception:
        pass
    return max(24 * _MIB, min(cap * 3 // 4, 96 * _MIB))


def _choose_row_tile(m_rows: int, h_pad: int, x_bytes: int, out_bytes: int,
                     w_block_rows: int, vmem_budget: int, ksplit: bool) -> int:
    """Pick the row tile TM.

    Accounts for: double-buffered x/out tiles, double-buffered W block (Pallas
    allocates 2 buffers per operand even for pinned blocks), double-buffered
    bias, ~3 f32 intermediates per output row produced inside the kernel, and
    the f32 accumulator scratch when K-splitting.  TM is capped at 512,
    256-aligned when large (v6e/v7x MXU), and capped so the row grid keeps
    ~8+ steps for pipeline depth / an even v7x 2-TC split.
    """
    fixed = 2 * (w_block_rows * h_pad * 2) + 2 * (h_pad * 4)   # bf16 W + f32 b
    per_row = h_pad * (2 * x_bytes + 2 * out_bytes + 3 * 4)    # bufs + f32 tmp
    if ksplit:
        per_row += h_pad * 4                                   # f32 acc scratch
    avail = max(vmem_budget - fixed, 8 * per_row)
    tm = int(avail // per_row)
    tm = max(8, min(tm, 512))
    # keep >= ~8 grid steps when there are enough rows (per-step cost ~0.35us)
    tm = min(tm, max(256, _round_up(max(m_rows // 8, 1), 8)))
    if tm >= 256:
        tm = (tm // 256) * 256
    else:
        tm = max(8, (tm // 8) * 8)
    return min(tm, _round_up(m_rows, 8))


def _residual_ffn_kernel(factor_ref, x_ref, w_ref, b_ref, o_ref):
    """One (TM, H) row tile: (x @ W_scaled + b_scaled) + x * input_factor.

    module_factor is pre-folded into W/b by the wrapper.  Matmul runs on the
    MXU in bf16 with f32 accumulation; the epilogue stays in f32 on the VPU.
    """
    x = x_ref[...]
    y = jnp.dot(x.astype(jnp.bfloat16), w_ref[...],
                preferred_element_type=jnp.float32)
    f = factor_ref[0, 0]
    o_ref[...] = (y + b_ref[...] + x.astype(jnp.float32) * f).astype(o_ref.dtype)


def _residual_ffn_kernel_ksplit(factor_ref, x_ref, w_ref, b_ref, o_ref,
                                acc_ref, *, tk: int):
    """Row tile with a K-reduction grid axis (pattern P3).

    The x row tile (TM, H) stays resident across k; W is streamed in (tk, H)
    chunks so the full-width weight never has to be pinned (v7x: 64 MiB VMEM).
    """
    k = pl.program_id(1)

    @pl.when(k == 0)
    def _():
        acc_ref[...] = jnp.zeros_like(acc_ref)

    off = pl.multiple_of(k * tk, 128)
    x_chunk = x_ref[:, pl.ds(off, tk)]
    acc_ref[...] += jnp.dot(x_chunk.astype(jnp.bfloat16), w_ref[...],
                            preferred_element_type=jnp.float32)

    @pl.when(k == pl.num_programs(1) - 1)
    def _():
        f = factor_ref[0, 0]
        out = acc_ref[...] + b_ref[...] + x_ref[...].astype(jnp.float32) * f
        o_ref[...] = out.astype(o_ref.dtype)


def residual_connection_forward(inputs, weight, bias,
                                module_factor: float = 1.0,
                                input_factor: float = 1.0,
                                force_ksplit: bool = False):
    """inputs: (B, S, H); weight: (H, H); bias: (H,).

    Computes (inputs @ weight + bias) * module_factor + inputs * input_factor,
    i.e. ResidualConnectionModule wrapping a Linear(hidden, hidden).
    """
    B, S, H = inputs.shape
    M = B * S
    H_pad = _round_up(H, 128)
    x_itemsize = jnp.dtype(inputs.dtype).itemsize

    vmem_limit = _vmem_limit_bytes()
    budget = int(vmem_limit * 0.8)          # headroom for compiler scratch

    # Stream W in K-chunks (2-D grid + VMEM f32 accumulator) once the
    # double-buffered full-width bf16 W would eat > 1/3 of the budget
    # (H_pad >= ~2k on v7x, ~2.5k+ on v5e/v6e).
    w_pinned_bytes = 2 * H_pad * H_pad * 2
    use_ksplit = force_ksplit or (w_pinned_bytes > budget // 3)
    if use_ksplit:
        TK = 512 if H_pad % 512 == 0 else (256 if H_pad % 256 == 0 else 128)
    else:
        TK = H_pad

    TM = _choose_row_tile(M, H_pad, x_itemsize, x_itemsize, TK, budget,
                          use_ksplit)

    # Lane-dense layout.  Only the hidden axis ever needs a host-side pad; the
    # row axis uses a cdiv grid (ragged last tile is masked by Pallas), so the
    # common H % 128 == 0 case is completely copy-free.
    x2d = inputs.reshape(M, H)
    h_padded = H_pad != H
    if h_padded:
        x2d = jnp.pad(x2d, ((0, 0), (0, H_pad - H)))

    # Fold the static module_factor into weight/bias; bf16 W halves HBM/VMEM
    # traffic while the MXU still accumulates in f32.
    w = weight * module_factor
    b = bias * module_factor
    if h_padded:
        w = jnp.pad(w, ((0, H_pad - H), (0, H_pad - H)))
        b = jnp.pad(b, (0, H_pad - H))
    w = w.astype(jnp.bfloat16)
    b2d = b.astype(jnp.float32).reshape(1, H_pad)
    # input_factor as an SMEM scalar operand -> no recompile per value.
    factor = jnp.full((1, 1), input_factor, dtype=jnp.float32)

    grid_m = pl.cdiv(M, TM)
    cost = pl.CostEstimate(
        flops=2 * M * H_pad * H_pad,
        transcendentals=0,
        bytes_accessed=(2 * M * H_pad * x_itemsize      # x read + out write
                        + H_pad * H_pad * 2 + H_pad * 4),
    )

    factor_spec = pl.BlockSpec(memory_space=pltpu.MemorySpace.SMEM)
    if use_ksplit:
        kernel = functools.partial(_residual_ffn_kernel_ksplit, tk=TK)
        grid = (grid_m, H_pad // TK)
        in_specs = [
            factor_spec,                                       # input_factor
            pl.BlockSpec((TM, H_pad), lambda i, k: (i, 0)),    # x rows (pinned over k)
            pl.BlockSpec((TK, H_pad), lambda i, k: (k, 0)),    # W K-chunk
            pl.BlockSpec((1, H_pad), lambda i, k: (0, 0)),     # bias
        ]
        out_specs = pl.BlockSpec((TM, H_pad), lambda i, k: (i, 0))
        scratch_shapes = [pltpu.VMEM((TM, H_pad), jnp.float32)]
        dim_sem = ("parallel", "arbitrary")
    else:
        kernel = _residual_ffn_kernel
        grid = (grid_m,)
        in_specs = [
            factor_spec,                                       # input_factor
            pl.BlockSpec((TM, H_pad), lambda i: (i, 0)),       # x row tile
            pl.BlockSpec((H_pad, H_pad), lambda i: (0, 0)),    # W (pinned)
            pl.BlockSpec((1, H_pad), lambda i: (0, 0)),        # bias (pinned)
        ]
        out_specs = pl.BlockSpec((TM, H_pad), lambda i: (i, 0))
        scratch_shapes = []
        dim_sem = ("parallel",)

    # Alias the output onto x2d only when x2d is a freshly padded slab; never
    # clobber (or force a defensive copy of) the caller's live input buffer.
    io_aliases = {1: 0} if h_padded else {}

    out2d = pl.pallas_call(
        kernel,
        out_shape=jax.ShapeDtypeStruct((M, H_pad), inputs.dtype),
        grid=grid,
        in_specs=in_specs,
        out_specs=out_specs,
        scratch_shapes=scratch_shapes,
        compiler_params=pltpu.CompilerParams(
            dimension_semantics=dim_sem,
            vmem_limit_bytes=vmem_limit),
        cost_estimate=cost,
        input_output_aliases=io_aliases,
    )(factor, x2d, w, b2d)

    if h_padded:
        out2d = out2d[:, :H]
    return out2d.reshape(B, S, H)


if __name__ == "__main__":
    # Small shapes consistent with the module's usage in an ASR block.
    B, S, H = 2, 8, 32
    module_factor = 0.5   # e.g. the 0.5 FFN factor used in Conformer
    input_factor = 1.0

    key = jax.random.PRNGKey(0)
    kx, kw, kb = jax.random.split(key, 3)
    x = jax.random.normal(kx, (B, S, H), dtype=jnp.float32)
    # Deterministic parameter init for the wrapped Linear(hidden, hidden).
    w = jax.random.normal(kw, (H, H), dtype=jnp.float32) * (1.0 / jnp.sqrt(H))
    b = jax.random.normal(kb, (H,), dtype=jnp.float32) * 0.01

    # Pure-f32 reference; tolerance loosened for the bf16 MXU matmul
    # (accumulation is f32, residual path is exact f32).
    ref = (x @ w + b) * module_factor + x * input_factor

    out = residual_connection_forward(x, w, b, module_factor, input_factor)
    out = jax.block_until_ready(out)
    assert out.shape == ref.shape
    assert jnp.allclose(out, ref, atol=5e-2, rtol=5e-2), "single-pass mismatch"

    # Also exercise the K-split (P3 accumulator) path at the same small shape.
    out_ks = residual_connection_forward(x, w, b, module_factor, input_factor,
                                         force_ksplit=True)
    out_ks = jax.block_until_ready(out_ks)
    assert jnp.allclose(out_ks, ref, atol=5e-2, rtol=5e-2), "k-split mismatch"

    print("KERNEL_OK")
</pallas_src>

<mosaic_0001>
module attributes {stable_mosaic.version = 11 : i64} {
  func.func @_residual_ffn_kernel(%arg0: i32, %arg1: memref<1x1xf32, #tpu.memory_space<smem>>, %arg2: memref<16x128xf32, #tpu.memory_space<vmem>>, %arg3: memref<128x128xbf16, #tpu.memory_space<vmem>>, %arg4: memref<1x128xf32, #tpu.memory_space<vmem>>, %arg5: memref<16x128xf32, #tpu.memory_space<vmem>>) attributes {dimension_semantics = [#tpu.dimension_semantics<parallel>], iteration_bounds = array<i64: 1>, scalar_prefetch = 0 : i64, scratch_operands = 0 : i64, tpu.core_type = #tpu.core_type<tc>, window_params = [{transform_indices = @transform_0, window_bounds = array<i64: 1, 1>}, {transform_indices = @transform_1, window_bounds = array<i64: 16, 128>}, {pipeline_mode = #tpu.pipeline_mode<synchronous>, transform_indices = @transform_2, window_bounds = array<i64: 128, 128>}, {pipeline_mode = #tpu.pipeline_mode<synchronous>, transform_indices = @transform_3, window_bounds = array<i64: 1, 128>}, {transform_indices = @transform_4, window_bounds = array<i64: 16, 128>}]} {
    %c0 = arith.constant 0 : index
    %c0_0 = arith.constant 0 : index
    %0 = vector.load %arg2[%c0, %c0_0] : memref<16x128xf32, #tpu.memory_space<vmem>>, vector<16x128xf32>
    %1 = arith.truncf %0 : vector<16x128xf32> to vector<16x128xbf16>
    %c0_1 = arith.constant 0 : index
    %c0_2 = arith.constant 0 : index
    %2 = vector.load %arg3[%c0_1, %c0_2] : memref<128x128xbf16, #tpu.memory_space<vmem>>, vector<128x128xbf16>
    %cst = arith.constant dense<0.000000e+00> : vector<16x128xf32>
    %3 = tpu.matmul %1, %2, %cst {dimension_numbers = #tpu.dot_dimension_numbers<[1], [0], [0], [1], [0, 0, 1, 1], [], []>} : vector<16x128xbf16>, vector<128x128xbf16>, vector<16x128xf32> -> vector<16x128xf32>
    %c0_3 = arith.constant 0 : index
    %c0_4 = arith.constant 0 : index
    %4 = memref.load %arg1[%c0_3, %c0_4] : memref<1x1xf32, #tpu.memory_space<smem>>
    %c0_5 = arith.constant 0 : index
    %c0_6 = arith.constant 0 : index
    %5 = vector.load %arg4[%c0_5, %c0_6] : memref<1x128xf32, #tpu.memory_space<vmem>>, vector<1x128xf32>
    %6 = vector.broadcast %5 : vector<1x128xf32> to vector<16x128xf32>
    %7 = arith.addf %3, %6 : vector<16x128xf32>
    %8 = vector.broadcast %4 : f32 to vector<16x128xf32>
    %9 = arith.mulf %0, %8 : vector<16x128xf32>
    %10 = arith.addf %7, %9 : vector<16x128xf32>
    %c0_7 = arith.constant 0 : index
    %c0_8 = arith.constant 0 : index
    %11 = vector.load %arg5[%c0_7, %c0_8] : memref<16x128xf32, #tpu.memory_space<vmem>>, vector<16x128xf32>
    tpu.vector_store %arg5[%c0_7, %c0_8], %10 {strides = array<i32>} : memref<16x128xf32, #tpu.memory_space<vmem>>, vector<16x128xf32>,
    return
  }
  func.func @transform_0(%arg0: i32) -> (i32, i32) {
    %c0_i32 = arith.constant 0 : i32
    %c0_i32_0 = arith.constant 0 : i32
    %c0_i32_1 = arith.constant 0 : i32
    return %c0_i32, %c0_i32_0 : i32, i32
  }
  func.func @transform_1(%arg0: i32) -> (i32, i32) {
    %c0_i32 = arith.constant 0 : i32
    %c0_i32_0 = arith.constant 0 : i32
    return %arg0, %c0_i32 : i32, i32
  }
  func.func @transform_2(%arg0: i32) -> (i32, i32) {
    %c0_i32 = arith.constant 0 : i32
    %c0_i32_0 = arith.constant 0 : i32
    %c0_i32_1 = arith.constant 0 : i32
    return %c0_i32, %c0_i32_0 : i32, i32
  }
  func.func @transform_3(%arg0: i32) -> (i32, i32) {
    %c0_i32 = arith.constant 0 : i32
    %c0_i32_0 = arith.constant 0 : i32
    %c0_i32_1 = arith.constant 0 : i32
    return %c0_i32, %c0_i32_0 : i32, i32
  }
  func.func @transform_4(%arg0: i32) -> (i32, i32) {
    %c0_i32 = arith.constant 0 : i32
    %c0_i32_0 = arith.constant 0 : i32
    return %arg0, %c0_i32 : i32, i32
  }
}

</mosaic_0001>

<llo_original>
// kernel: tpu_custom_call.1
$region0: #{tpu_custom_call.1}
  #allocation0 [shape = 'u32[]', space=smem, size = 0x4, offset = 0x4, fixed_abs, tag = 'smem constant byte address 0x4 - core index']
  #allocation1 [shape = 'u32[144,128]{1,0:T(1,128)}', space=vmem, size = 0x12000, scoped, tag = 'internal scratch']
  #allocation2 [shape = 'f32[1,1]{1,0:T(1,128)S(6)}', space=smem, size = 0x200, scoped, tag = 'scoped memory for tpu_custom_call.1']
  %s0 = inlined_call_operand.<no memory space> [shape: f32[1,1], index: 0, kind: input, shape index: {}]
  %s1 = inlined_call_operand.hbm [shape: f32[16,128], index: 1, kind: input, shape index: {}, may-alias: {1,4}]
  %s2 = inlined_call_operand.hbm [shape: bf16[128,128], index: 2, kind: input, shape index: {}]
  %s3 = inlined_call_operand.vmem [shape: f32[1,128], index: 3, kind: input, shape index: {}]
  %s4 = inlined_call_operand.hbm [shape: f32[16,128], index: 4, kind: output, shape index: {}, may-alias: {1,4}]
  %s5 = sld [smem:[#allocation0]]
  $region34: #{tpu_custom_call.1} parent=0
    _
  %s7 = ssub.s32 1, %s5
  %s8 = scalar_select 0, %s7, %s5
  %9 = sst [smem:[#allocation2]] %s0
  $region1: #{tpu_custom_call.1} parent=0
    #allocation3 [shape = 'u8[8192]{0}', space=vmem, size = 0x2000, scoped, tag = 'input window, operand 1, single buffered']
    #allocation4 [shape = 's32[1]{0}', space=sflag, size = 0x4, scoped, tag = 'scoped memory for tpu_custom_call.1']
    #allocation5 [shape = 's32[1]{0}', space=sflag, size = 0x4, scoped, tag = 'scoped memory for tpu_custom_call.1']
    #allocation6 [shape = 'u8[32768]{0}', space=vmem, size = 0x8000, scoped, tag = 'input window, operand 2, single buffered']
    #allocation7 [shape = 's32[1]{0}', space=sflag, size = 0x4, scoped, tag = 'scoped memory for tpu_custom_call.1']
    #allocation8 [shape = 'u8[8192]{0}', space=vmem, size = 0x2000, scoped, tag = 'output window, operand 0, single buffered']
    %10 = vsyncpa [#allocation4], 0
    %11 = vsyncpa [#allocation7], 0
    %12 = vsyncpa [#allocation5], 0
    // Predicated region
    $region2: #{tpu_custom_call.1} parent=1 // pred_check
      _
    $region3: #{tpu_custom_call.1} parent=1 // pred_check_branch
      %14 = sbr.rel (0) target = $region5
    $region4: #{tpu_custom_call.1} parent=1 // pred_region
      _
    $region5: #{tpu_custom_call.1} parent=1 // pred_fallthru
      _
    // Predicated region
    $region6: #{tpu_custom_call.1} parent=1 // pred_check
      _
    $region7: #{tpu_custom_call.1} parent=1 // pred_check_branch
      %16 = sbr.rel (0) target = $region9
    $region8: #{tpu_custom_call.1} parent=1 // pred_region
      %s18 = ssub.s32 256, 256
      %19 = vsyncadd [#allocation4], %s18
      %s20 = sshll.u32 [#allocation3], 4
      %s21 = int_to_ptr.vmem [resolvable:$true] %s20
      %26 = dma.hbm_to_vmem [thread:$0]  %s1, 256, %s21, [#allocation4], 128, 128, 8
    $region9: #{tpu_custom_call.1} parent=1 // pred_fallthru
      _
    // Predicated region
    $region10: #{tpu_custom_call.1} parent=1 // pred_check
      _
    $region11: #{tpu_custom_call.1} parent=1 // pred_check_branch
      %28 = sbr.rel (0) target = $region13
    $region12: #{tpu_custom_call.1} parent=1 // pred_region
      %s30 = ssub.s32 1024, 1024
      %31 = vsyncadd [#allocation7], %s30
      %s32 = sshll.u32 [#allocation6], 4
      %s33 = int_to_ptr.vmem [resolvable:$true] %s32
      %38 = dma.hbm_to_vmem [thread:$0]  %s2, 1024, %s33, [#allocation7], 64, 64, 4
    $region13: #{tpu_custom_call.1} parent=1 // pred_fallthru
      _
    // Predicated region
    $region14: #{tpu_custom_call.1} parent=1 // pred_check
      _
    $region15: #{tpu_custom_call.1} parent=1 // pred_check_branch
      %40 = sbr.rel (0) target = $region17
    $region16: #{tpu_custom_call.1} parent=1 // pred_region
      _
    $region17: #{tpu_custom_call.1} parent=1 // pred_fallthru
      _
    // Predicated region
    $region18: #{tpu_custom_call.1} parent=1 // pred_check
      _
    $region19: #{tpu_custom_call.1} parent=1 // pred_check_branch
      %42 = sbr.rel (0) target = $region21
    $region20: #{tpu_custom_call.1} parent=1 // pred_region
      %43 = dma.done [#allocation4], 256
    $region21: #{tpu_custom_call.1} parent=1 // pred_fallthru
      _
    // Predicated region
    $region22: #{tpu_custom_call.1} parent=1 // pred_check
      _
    $region23: #{tpu_custom_call.1} parent=1 // pred_check_branch
      %45 = sbr.rel (0) target = $region25
    $region24: #{tpu_custom_call.1} parent=1 // pred_region
      %46 = dma.done [#allocation7], 1024
    $region25: #{tpu_custom_call.1} parent=1 // pred_fallthru
      _
    %v48 = vld [vmem:[#allocation3] sm:$0xff]
    %v49 = vld [vmem:[#allocation3 + $0x8] sm:$0xff]
    %v50 = vpack.c.bf16 %v49, %v48
    %v51 = vld [vmem:[#allocation6] sm:$0xf]
    %v52 = vld [vmem:[#allocation6 + $0x4] sm:$0xf]
    %v53 = vld [vmem:[#allocation6 + $0x8] sm:$0xf]
    %v54 = vld [vmem:[#allocation6 + $0xc] sm:$0xf]
    %v55 = vld [vmem:[#allocation6 + $0x10] sm:$0xf]
    %v56 = vld [vmem:[#allocation6 + $0x14] sm:$0xf]
    %v57 = vld [vmem:[#allocation6 + $0x18] sm:$0xf]
    %v58 = vld [vmem:[#allocation6 + $0x1c] sm:$0xf]
    %v59 = vld [vmem:[#allocation6 + $0x20] sm:$0xf]
    %v60 = vld [vmem:[#allocation6 + $0x24] sm:$0xf]
    %v61 = vld [vmem:[#allocation6 + $0x28] sm:$0xf]
    %v62 = vld [vmem:[#allocation6 + $0x2c] sm:$0xf]
    %v63 = vld [vmem:[#allocation6 + $0x30] sm:$0xf]
    %v64 = vld [vmem:[#allocation6 + $0x34] sm:$0xf]
    %v65 = vld [vmem:[#allocation6 + $0x38] sm:$0xf]
    %v66 = vld [vmem:[#allocation6 + $0x3c] sm:$0xf]
    %s67 = sld [smem:[#allocation2]]
    %v68 = vld [vmem:[%s3] sm:$0x1]
    %v70 = vlaneseq
    %v71 = vshrl.u32 %v70, 7
    %v72 = vsub.s32 0, %v71
    %v73 = vrot.slane %v68, %v72
    %v91 = vunpack.c.l.b16 %v51
    %v92 = vunpack.c.l.b16 %v52
    %v93 = vunpack.c.l.b16 %v53
    %v94 = vunpack.c.l.b16 %v54
    %v95 = vunpack.c.l.b16 %v55
    %v96 = vunpack.c.l.b16 %v56
    %v97 = vunpack.c.l.b16 %v57
    %v98 = vunpack.c.l.b16 %v58
    %v99 = vunpack.c.l.b16 %v59
    %v100 = vunpack.c.l.b16 %v60
    %v101 = vunpack.c.l.b16 %v61
    %v102 = vunpack.c.l.b16 %v62
    %v103 = vunpack.c.l.b16 %v63
    %v104 = vunpack.c.l.b16 %v64
    %v105 = vunpack.c.l.b16 %v65
    %v106 = vunpack.c.l.b16 %v66
    %v107 = vpack.c.b16 %v92, %v91
    %v108 = vpack.c.b16 %v94, %v93
    %v109 = vpack.c.b16 %v96, %v95
    %v110 = vpack.c.b16 %v98, %v97
    %v111 = vpack.c.b16 %v100, %v99
    %v112 = vpack.c.b16 %v102, %v101
    %v113 = vpack.c.b16 %v104, %v103
    %v114 = vpack.c.b16 %v106, %v105
    %123 = vmatprep.subr.bf16.mxu0 0
    %124 = vmatpush1.bf16.msra.mxu0 %v107
    %125 = vmatprep.subr.bf16.mxu0 0
    %126 = vmatpush1.bf16.msra.mxu0 %v108
    %127 = vmatprep.subr.bf16.mxu0 0
    %128 = vmatpush1.bf16.msra.mxu0 %v109
    %129 = vmatprep.subr.bf16.mxu0 0
    %130 = vmatpush1.bf16.msra.mxu0 %v110
    %131 = vmatprep.subr.bf16.mxu0 0
    %132 = vmatpush1.bf16.msra.mxu0 %v111
    %133 = vmatprep.subr.bf16.mxu0 0
    %134 = vmatpush1.bf16.msra.mxu0 %v112
    %135 = vmatprep.subr.bf16.mxu0 0
    %136 = vmatpush1.bf16.msra.mxu0 %v113
    %137 = vmatprep.subr.bf16.mxu0 0
    %138 = vmatpush1.bf16.msra.mxu0 %v114
    %139 = vmatprep.subr.bf16.mxu0 0
    %140 = vmatpush1.bf16.msra.mxu0 0
    %141 = vmatprep.subr.bf16.mxu0 0
    %142 = vmatpush1.bf16.msra.mxu0 0
    %143 = vmatprep.subr.bf16.mxu0 0
    %144 = vmatpush1.bf16.msra.mxu0 0
    %145 = vmatprep.subr.bf16.mxu0 0
    %146 = vmatpush1.bf16.msra.mxu0 0
    %147 = vmatprep.subr.bf16.mxu0 0
    %148 = vmatpush1.bf16.msra.mxu0 0
    %149 = vmatprep.subr.bf16.mxu0 0
    %150 = vmatpush1.bf16.msra.mxu0 0
    %151 = vmatprep.subr.bf16.mxu0 0
    %152 = vmatpush1.bf16.msra.mxu0 0
    %153 = vmatprep.subr.bf16.mxu0 0
    %154 = vmatpush1.bf16.msra.mxu0 0
    %155 = vmatprep.mubr.bf16.mxu0 0
    %156 = vmatmul.mubr.bf16.gmra.mrb[0].mxu0 %v50
    %v157 = vpop.f32.mrb[0].mxu0
    %v158 = vadd.f32 %v73, %v157
    %v159 = vpop.f32.mrb[0].mxu0
    %v160 = vpop.f32.mrb[0].mxu0
    %v161 = vadd.f32 %v73, %v160
    %v162 = vpop.f32.mrb[0].mxu0
    %163 = vdwg.mxu0
    %v164 = vstv %s67
    %v165 = vmul.f32 %v48, %v164
    %v166 = vmul.f32 %v49, %v164
    %v167 = vadd.f32 %v158, %v165
    %v168 = vadd.f32 %v161, %v166
    %169 = vst [vmem:[#allocation8] sm:$0xff] %v167
    %170 = vst [vmem:[#allocation8 + $0x8] sm:$0xff] %v168
    // Predicated region
    $region26: #{tpu_custom_call.1} parent=1 // pred_check
      _
    $region27: #{tpu_custom_call.1} parent=1 // pred_check_branch
      %172 = sbr.rel (0) target = $region29
    $region28: #{tpu_custom_call.1} parent=1 // pred_region
      %s174 = ssub.s32 256, 256
      %175 = vsyncadd [#allocation5], %s174
      %s176 = sshll.u32 [#allocation8], 4
      %s177 = int_to_ptr.vmem [resolvable:$true] %s176
      %182 = dma.vmem_to_hbm [thread:$0]  %s177, 256, %s4, [#allocation5], 128, 128, 8
    $region29: #{tpu_custom_call.1} parent=1 // pred_fallthru
      _
    // Predicated region
    $region30: #{tpu_custom_call.1} parent=1 // pred_check
      _
    $region31: #{tpu_custom_call.1} parent=1 // pred_check_branch
      %184 = sbr.rel (0) target = $region33
    $region32: #{tpu_custom_call.1} parent=1 // pred_region
      %185 = dma.done [#allocation5], 256
    $region33: #{tpu_custom_call.1} parent=1 // pred_fallthru
      _
    %186 = vsyncpa [#allocation4], 1
    %187 = vsyncpa [#allocation7], 1
    %188 = vsyncpa [#allocation5], 1

</llo_original>
